<compile_context>
chip_gen: v7x
topology: tpu7x:2x2x1
jax: 0.10.0
libtpu: 0.0.40
codegen_flags: <defaults>
</compile_context>

<pallas_src>
import functools
import math

import jax
import jax.numpy as jnp
import numpy as np
from jax.experimental import pallas as pl
from jax.experimental.pallas import tpu as pltpu


def _residual_block_kernel(training: bool, p: float,
                           seed_ref, x_ref, w_ref, params_ref,
                           res_ref, o_ref):
    # ---- Linear: y = x @ W + b (MXU matmul, f32 accumulation) ---------------
    y = jnp.dot(x_ref[...], w_ref[...], preferred_element_type=jnp.float32)

    params = params_ref[...]               # (3, E): rows = bias, gamma, beta
    bias = params[0:1, :]
    gamma = params[1:2, :]
    beta = params[2:3, :]
    y = y + bias                            # (tm, E) + (1, E)

    # ---- LayerNorm over last dim: fused single-pass stats --------------------
    # Both reductions are issued from the same y (shorter XLU critical path),
    # and rsqrt(var+eps) is folded with gamma into one scale vector.
    E = y.shape[-1]
    inv_e = 1.0 / E
    s1 = jnp.sum(y, axis=-1, keepdims=True)
    s2 = jnp.sum(y * y, axis=-1, keepdims=True)
    mean = s1 * inv_e
    var = s2 * inv_e - mean * mean          # biased variance (matches torch LN)
    scale = jax.lax.rsqrt(var + 1e-5)       # (tm, 1)
    y = (y - mean) * (scale * gamma) + beta

    # ---- LeakyReLU (default negative_slope = 0.01) ---------------------------
    y = jnp.where(y >= 0, y, 0.01 * y)

    # ---- Dropout(p): identity in eval mode; hardware PRNG in train mode ------
    if training and p > 0.0:
        if p >= 1.0:
            y = jnp.zeros_like(y)
        else:
            pltpu.prng_seed(seed_ref[0] + pl.program_id(0))
            bits = pltpu.bitcast(pltpu.prng_random_bits(y.shape), jnp.uint32)
            thresh = jnp.uint32(min(int((1.0 - p) * (2 ** 32)), 2 ** 32 - 1))
            keep = bits < thresh
            y = jnp.where(keep, y * (1.0 / (1.0 - p)), 0.0)

    # ---- Residual add ---------------------------------------------------------
    o_ref[...] = (y + res_ref[...]).astype(o_ref.dtype)


def _choose_tm(B: int, D_in: int, E: int, itemsize: int = 4,
               budget: int = 48 << 20) -> int:
    """Largest row tile whose double-buffered tiles + resident W fit VMEM."""
    w_bytes = D_in * E * itemsize + 8 * 128 * itemsize   # resident W + padded params

    def tile_bytes(tm):
        # double-buffered x tile + residual tile + out tile
        return 2 * (tm * D_in + 2 * tm * E) * itemsize

    if tile_bytes(B) + w_bytes <= budget:
        return B                       # single grid step: no pipeline overhead
    for tm in (1024, 512, 256, 128, 64, 32, 16, 8):
        if tm <= B and B % tm == 0 and tile_bytes(tm) + w_bytes <= budget:
            return tm
    return 8 if B % 8 == 0 else B


def residual_block(x, residual, w, b, gamma, beta, *, seed=0,
                   training=False, p=0.1, tm=None):
    B, D_in = x.shape
    E = w.shape[1]
    assert residual.shape == (B, E)

    if tm is None:
        tm = _choose_tm(B, D_in, E)
    # Block-shape constraint: second-to-last dim must be a multiple of 8 or the
    # full array extent.
    assert B % tm == 0 and (tm == B or tm % 8 == 0), (B, tm)

    # The weight is kept fully resident in VMEM; guard against the smallest
    # generation (v7x: 64 MiB physical VMEM).
    w_bytes = D_in * E * 4
    assert w_bytes <= 48 << 20, "W too large to keep resident in VMEM"
    # TODO(synk): for very large weights, add an N grid axis (tile W columns in
    # multiples of 128) or a K axis with an f32 accumulator + pl.when finalize.

    # Pack bias / gamma / beta into one (3, E) block: one DMA, one padded tile.
    params = jnp.stack([b, gamma, beta], axis=0).astype(jnp.float32)
    seed_arr = jnp.array([seed], dtype=jnp.int32)

    # Explicit VMEM budget for the chosen tile, with headroom, capped below the
    # smallest physical VMEM (v7x = 64 MiB).
    needed = 2 * (tm * D_in + 2 * tm * E) * 4 + w_bytes + 8 * 128 * 4
    vmem_limit = int(min(max(2 * needed, 32 << 20), 60 << 20))

    kernel = functools.partial(_residual_block_kernel, training, p)

    # NOTE: E=64 is below the 128-lane vreg width, so stores are masked; a
    # lane-dense repack (two logical rows per physical row) would help further
    # but complicates the per-row LN reduction, so it is not done here.
    return pl.pallas_call(
        kernel,
        out_shape=jax.ShapeDtypeStruct((B, E), x.dtype),
        grid=(B // tm,),
        in_specs=[
            pl.BlockSpec(memory_space=pltpu.SMEM),          # seed (scalar)
            pl.BlockSpec((tm, D_in), lambda i: (i, 0)),     # x row tile
            pl.BlockSpec((D_in, E), lambda i: (0, 0)),      # W, resident
            pl.BlockSpec((3, E), lambda i: (0, 0)),         # packed b/gamma/beta
            pl.BlockSpec((tm, E), lambda i: (i, 0)),        # residual row tile
        ],
        out_specs=pl.BlockSpec((tm, E), lambda i: (i, 0)),
        compiler_params=pltpu.CompilerParams(
            dimension_semantics=("parallel",),              # independent rows
            vmem_limit_bytes=vmem_limit,
        ),
    )(seed_arr, x, w, params, residual)


def _reference(x, residual, w, b, gamma, beta):
    y = x @ w + b
    mean = jnp.mean(y, axis=-1, keepdims=True)
    var = jnp.mean((y - mean) ** 2, axis=-1, keepdims=True)
    y = (y - mean) / jnp.sqrt(var + 1e-5)
    y = y * gamma + beta
    y = jnp.where(y >= 0, y, 0.01 * y)        # LeakyReLU; dropout = identity (eval)
    return y + residual


if __name__ == "__main__":
    batch, input_dim, emb_size = 16, 32, 64

    key = jax.random.PRNGKey(0)
    k_x, k_r, k_w, k_b = jax.random.split(key, 4)

    x = jax.random.normal(k_x, (batch, input_dim), dtype=jnp.float32)
    residual = jax.random.normal(k_r, (batch, emb_size), dtype=jnp.float32)

    # Deterministic parameter init (shapes from nn.Linear / nn.LayerNorm).
    bound = 1.0 / np.sqrt(input_dim)
    w = jax.random.uniform(k_w, (input_dim, emb_size),
                           minval=-bound, maxval=bound, dtype=jnp.float32)
    b = jax.random.uniform(k_b, (emb_size,),
                           minval=-bound, maxval=bound, dtype=jnp.float32)
    gamma = jnp.ones((emb_size,), dtype=jnp.float32)
    beta = jnp.zeros((emb_size,), dtype=jnp.float32)

    # Eval mode (dropout = identity); matches PyTorch .eval() forward.
    # TODO(synk): training-mode dropout uses TPU hardware PRNG, so its mask
    # cannot bit-match torch's RNG stream (statistics match).
    out = residual_block(x, residual, w, b, gamma, beta, training=False)
    out = jax.block_until_ready(out)

    ref = _reference(x, residual, w, b, gamma, beta)
    np.testing.assert_allclose(np.asarray(out), np.asarray(ref),
                               rtol=1e-5, atol=5e-5)
    print("KERNEL_OK")
</pallas_src>

<mosaic_0001>
module attributes {stable_mosaic.version = 11 : i64} {
  func.func @_residual_block_kernel(%arg0: i32, %arg1: memref<1xi32, #tpu.memory_space<smem>>, %arg2: memref<16x32xf32, #tpu.memory_space<vmem>>, %arg3: memref<32x64xf32, #tpu.memory_space<vmem>>, %arg4: memref<3x64xf32, #tpu.memory_space<vmem>>, %arg5: memref<16x64xf32, #tpu.memory_space<vmem>>, %arg6: memref<16x64xf32, #tpu.memory_space<vmem>>) attributes {dimension_semantics = [#tpu.dimension_semantics<parallel>], iteration_bounds = array<i64: 1>, scalar_prefetch = 0 : i64, scratch_operands = 0 : i64, tpu.core_type = #tpu.core_type<tc>, window_params = [{transform_indices = @transform_0, window_bounds = array<i64: 1>}, {transform_indices = @transform_1, window_bounds = array<i64: 16, 32>}, {pipeline_mode = #tpu.pipeline_mode<synchronous>, transform_indices = @transform_2, window_bounds = array<i64: 32, 64>}, {pipeline_mode = #tpu.pipeline_mode<synchronous>, transform_indices = @transform_3, window_bounds = array<i64: 3, 64>}, {transform_indices = @transform_4, window_bounds = array<i64: 16, 64>}, {transform_indices = @transform_5, window_bounds = array<i64: 16, 64>}]} {
    %c0 = arith.constant 0 : index
    %c0_0 = arith.constant 0 : index
    %0 = vector.load %arg2[%c0, %c0_0] : memref<16x32xf32, #tpu.memory_space<vmem>>, vector<16x32xf32>
    %c0_1 = arith.constant 0 : index
    %c0_2 = arith.constant 0 : index
    %1 = vector.load %arg3[%c0_1, %c0_2] : memref<32x64xf32, #tpu.memory_space<vmem>>, vector<32x64xf32>
    %cst = arith.constant dense<0.000000e+00> : vector<16x64xf32>
    %2 = tpu.matmul %0, %1, %cst {dimension_numbers = #tpu.dot_dimension_numbers<[1], [0], [0], [1], [0, 0, 1, 1], [], []>} : vector<16x32xf32>, vector<32x64xf32>, vector<16x64xf32> -> vector<16x64xf32>
    %c0_3 = arith.constant 0 : index
    %c0_4 = arith.constant 0 : index
    %3 = vector.load %arg4[%c0_3, %c0_4] : memref<3x64xf32, #tpu.memory_space<vmem>>, vector<3x64xf32>
    %4 = vector.extract_strided_slice %3 {offsets = [0, 0], sizes = [1, 64], strides = [1, 1]} : vector<3x64xf32> to vector<1x64xf32>
    %5 = vector.extract_strided_slice %3 {offsets = [1, 0], sizes = [1, 64], strides = [1, 1]} : vector<3x64xf32> to vector<1x64xf32>
    %6 = vector.extract_strided_slice %3 {offsets = [2, 0], sizes = [1, 64], strides = [1, 1]} : vector<3x64xf32> to vector<1x64xf32>
    %7 = vector.broadcast %4 : vector<1x64xf32> to vector<16x64xf32>
    %8 = arith.addf %2, %7 : vector<16x64xf32>
    %cst_5 = arith.constant dense<0.000000e+00> : vector<16xf32>
    %9 = vector.multi_reduction <add>, %8, %cst_5 [1] : vector<16x64xf32> to vector<16xf32>
    %10 = vector.shape_cast %9 : vector<16xf32> to vector<16x1xf32>
    %11 = arith.mulf %8, %8 : vector<16x64xf32>
    %cst_6 = arith.constant dense<0.000000e+00> : vector<16xf32>
    %12 = vector.multi_reduction <add>, %11, %cst_6 [1] : vector<16x64xf32> to vector<16xf32>
    %13 = vector.shape_cast %12 : vector<16xf32> to vector<16x1xf32>
    %cst_7 = arith.constant 1.562500e-02 : f32
    %14 = vector.broadcast %cst_7 : f32 to vector<16x1xf32>
    %15 = arith.mulf %10, %14 : vector<16x1xf32>
    %cst_8 = arith.constant 1.562500e-02 : f32
    %16 = vector.broadcast %cst_8 : f32 to vector<16x1xf32>
    %17 = arith.mulf %13, %16 : vector<16x1xf32>
    %18 = arith.mulf %15, %15 : vector<16x1xf32>
    %19 = arith.subf %17, %18 : vector<16x1xf32>
    %cst_9 = arith.constant 9.99999974E-6 : f32
    %20 = vector.broadcast %cst_9 : f32 to vector<16x1xf32>
    %21 = arith.addf %19, %20 : vector<16x1xf32>
    %22 = math.rsqrt %21 : vector<16x1xf32>
    %23 = vector.broadcast %15 : vector<16x1xf32> to vector<16x64xf32>
    %24 = arith.subf %8, %23 : vector<16x64xf32>
    %25 = vector.broadcast %22 : vector<16x1xf32> to vector<16x64xf32>
    %26 = vector.broadcast %5 : vector<1x64xf32> to vector<16x64xf32>
    %27 = arith.mulf %25, %26 : vector<16x64xf32>
    %28 = arith.mulf %24, %27 : vector<16x64xf32>
    %29 = vector.broadcast %6 : vector<1x64xf32> to vector<16x64xf32>
    %30 = arith.addf %28, %29 : vector<16x64xf32>
    %cst_10 = arith.constant 0.000000e+00 : f32
    %31 = vector.broadcast %cst_10 : f32 to vector<16x64xf32>
    %32 = arith.cmpf oge, %30, %31 : vector<16x64xf32>
    %cst_11 = arith.constant 0.00999999977 : f32
    %33 = vector.broadcast %cst_11 : f32 to vector<16x64xf32>
    %34 = arith.mulf %33, %30 : vector<16x64xf32>
    %35 = arith.select %32, %30, %34 : vector<16x64xi1>, vector<16x64xf32>
    %c0_12 = arith.constant 0 : index
    %c0_13 = arith.constant 0 : index
    %36 = vector.load %arg5[%c0_12, %c0_13] : memref<16x64xf32, #tpu.memory_space<vmem>>, vector<16x64xf32>
    %37 = arith.addf %35, %36 : vector<16x64xf32>
    %c0_14 = arith.constant 0 : index
    %c0_15 = arith.constant 0 : index
    %38 = vector.load %arg6[%c0_14, %c0_15] : memref<16x64xf32, #tpu.memory_space<vmem>>, vector<16x64xf32>
    tpu.vector_store %arg6[%c0_14, %c0_15], %37 {strides = array<i32>} : memref<16x64xf32, #tpu.memory_space<vmem>>, vector<16x64xf32>,
    return
  }
  func.func @transform_0(%arg0: i32) -> i32 {
    %c0_i32 = arith.constant 0 : i32
    %c0_i32_0 = arith.constant 0 : i32
    return %c0_i32 : i32
  }
  func.func @transform_1(%arg0: i32) -> (i32, i32) {
    %c0_i32 = arith.constant 0 : i32
    %c0_i32_0 = arith.constant 0 : i32
    return %arg0, %c0_i32 : i32, i32
  }
  func.func @transform_2(%arg0: i32) -> (i32, i32) {
    %c0_i32 = arith.constant 0 : i32
    %c0_i32_0 = arith.constant 0 : i32
    %c0_i32_1 = arith.constant 0 : i32
    return %c0_i32, %c0_i32_0 : i32, i32
  }
  func.func @transform_3(%arg0: i32) -> (i32, i32) {
    %c0_i32 = arith.constant 0 : i32
    %c0_i32_0 = arith.constant 0 : i32
    %c0_i32_1 = arith.constant 0 : i32
    return %c0_i32, %c0_i32_0 : i32, i32
  }
  func.func @transform_4(%arg0: i32) -> (i32, i32) {
    %c0_i32 = arith.constant 0 : i32
    %c0_i32_0 = arith.constant 0 : i32
    return %arg0, %c0_i32 : i32, i32
  }
  func.func @transform_5(%arg0: i32) -> (i32, i32) {
    %c0_i32 = arith.constant 0 : i32
    %c0_i32_0 = arith.constant 0 : i32
    return %arg0, %c0_i32 : i32, i32
  }
}

</mosaic_0001>

<llo_original>
// kernel: tpu_custom_call.1
$region0: #{tpu_custom_call.1}
  #allocation0 [shape = 'u32[]', space=smem, size = 0x4, offset = 0x4, fixed_abs, tag = 'smem constant byte address 0x4 - core index']
  #allocation1 [shape = 'u32[144,128]{1,0:T(1,128)}', space=vmem, size = 0x12000, scoped, tag = 'internal scratch']
  #allocation2 [shape = 's32[1]{0:T(128)S(6)}', space=smem, size = 0x200, scoped, tag = 'scoped memory for tpu_custom_call.1']
  %s0 = inlined_call_operand.<no memory space> [shape: s32[1], index: 0, kind: input, shape index: {}]
  %s1 = inlined_call_operand.hbm [shape: f32[16,32], index: 1, kind: input, shape index: {}]
  %s2 = inlined_call_operand.hbm [shape: f32[32,64], index: 2, kind: input, shape index: {}]
  %s3 = inlined_call_operand.vmem [shape: f32[3,64], index: 3, kind: input, shape index: {}]
  %s4 = inlined_call_operand.hbm [shape: f32[16,64], index: 4, kind: input, shape index: {}]
  %s5 = inlined_call_operand.hbm [shape: f32[16,64], index: 5, kind: output, shape index: {}]
  %s6 = sld [smem:[#allocation0]]
  $region42: #{tpu_custom_call.1} parent=0
    _
  %s8 = ssub.s32 1, %s6
  %s9 = scalar_select 0, %s8, %s6
  %10 = sst [smem:[#allocation2]] %s0
  $region1: #{tpu_custom_call.1} parent=0
    #allocation3 [shape = 'u8[8192]{0}', space=vmem, size = 0x2000, scoped, tag = 'input window, operand 1, single buffered']
    #allocation4 [shape = 's32[1]{0}', space=sflag, size = 0x4, scoped, tag = 'scoped memory for tpu_custom_call.1']
    #allocation5 [shape = 's32[1]{0}', space=sflag, size = 0x4, scoped, tag = 'scoped memory for tpu_custom_call.1']
    #allocation6 [shape = 'u8[16384]{0}', space=vmem, size = 0x4000, scoped, tag = 'input window, operand 2, single buffered']
    #allocation7 [shape = 's32[1]{0}', space=sflag, size = 0x4, scoped, tag = 'scoped memory for tpu_custom_call.1']
    #allocation8 [shape = 'u8[8192]{0}', space=vmem, size = 0x2000, scoped, tag = 'input window, operand 4, single buffered']
    #allocation9 [shape = 'u8[8192]{0}', space=vmem, size = 0x2000, scoped, tag = 'output window, operand 0, single buffered']
    %11 = vsyncpa [#allocation4], 0
    %12 = vsyncpa [#allocation7], 0
    %13 = vsyncpa [#allocation5], 0
    // Predicated region
    $region2: #{tpu_custom_call.1} parent=1 // pred_check
      _
    $region3: #{tpu_custom_call.1} parent=1 // pred_check_branch
      %15 = sbr.rel (0) target = $region5
    $region4: #{tpu_custom_call.1} parent=1 // pred_region
      _
    $region5: #{tpu_custom_call.1} parent=1 // pred_fallthru
      _
    // Predicated region
    $region6: #{tpu_custom_call.1} parent=1 // pred_check
      _
    $region7: #{tpu_custom_call.1} parent=1 // pred_check_branch
      %17 = sbr.rel (0) target = $region9
    $region8: #{tpu_custom_call.1} parent=1 // pred_region
      %s19 = ssub.s32 256, 256
      %20 = vsyncadd [#allocation4], %s19
      %s21 = sshll.u32 [#allocation3], 4
      %s22 = int_to_ptr.vmem [resolvable:$true] %s21
      %27 = dma.hbm_to_vmem [thread:$0]  %s1, 256, %s22, [#allocation4], 128, 128, 8
    $region9: #{tpu_custom_call.1} parent=1 // pred_fallthru
      _
    // Predicated region
    $region10: #{tpu_custom_call.1} parent=1 // pred_check
      _
    $region11: #{tpu_custom_call.1} parent=1 // pred_check_branch
      %29 = sbr.rel (0) target = $region13
    $region12: #{tpu_custom_call.1} parent=1 // pred_region
      %s31 = ssub.s32 512, 512
      %32 = vsyncadd [#allocation7], %s31
      %s33 = sshll.u32 [#allocation6], 4
      %s34 = int_to_ptr.vmem [resolvable:$true] %s33
      %39 = dma.hbm_to_vmem [thread:$0]  %s2, 512, %s34, [#allocation7], 128, 128, 8
    $region13: #{tpu_custom_call.1} parent=1 // pred_fallthru
      _
    // Predicated region
    $region14: #{tpu_custom_call.1} parent=1 // pred_check
      _
    $region15: #{tpu_custom_call.1} parent=1 // pred_check_branch
      %41 = sbr.rel (0) target = $region17
    $region16: #{tpu_custom_call.1} parent=1 // pred_region
      _
    $region17: #{tpu_custom_call.1} parent=1 // pred_fallthru
      _
    // Predicated region
    $region18: #{tpu_custom_call.1} parent=1 // pred_check
      _
    $region19: #{tpu_custom_call.1} parent=1 // pred_check_branch
      %43 = sbr.rel (0) target = $region21
    $region20: #{tpu_custom_call.1} parent=1 // pred_region
      %s45 = ssub.s32 256, 256
      %46 = vsyncadd [#allocation7], %s45
      %s47 = sshll.u32 [#allocation8], 4
      %s48 = int_to_ptr.vmem [resolvable:$true] %s47
      %53 = dma.hbm_to_vmem [thread:$0]  %s4, 256, %s48, [#allocation7], 128, 128, 8
    $region21: #{tpu_custom_call.1} parent=1 // pred_fallthru
      _
    // Predicated region
    $region22: #{tpu_custom_call.1} parent=1 // pred_check
      _
    $region23: #{tpu_custom_call.1} parent=1 // pred_check_branch
      %55 = sbr.rel (0) target = $region25
    $region24: #{tpu_custom_call.1} parent=1 // pred_region
      %56 = dma.done [#allocation4], 256
    $region25: #{tpu_custom_call.1} parent=1 // pred_fallthru
      _
    // Predicated region
    $region26: #{tpu_custom_call.1} parent=1 // pred_check
      _
    $region27: #{tpu_custom_call.1} parent=1 // pred_check_branch
      %58 = sbr.rel (0) target = $region29
    $region28: #{tpu_custom_call.1} parent=1 // pred_region
      %59 = dma.done [#allocation7], 512
    $region29: #{tpu_custom_call.1} parent=1 // pred_fallthru
      _
    // Predicated region
    $region30: #{tpu_custom_call.1} parent=1 // pred_check
      _
    $region31: #{tpu_custom_call.1} parent=1 // pred_check_branch
      %61 = sbr.rel (0) target = $region33
    $region32: #{tpu_custom_call.1} parent=1 // pred_region
      %62 = dma.done [#allocation7], 256
    $region33: #{tpu_custom_call.1} parent=1 // pred_fallthru
      _
    %v63 = vld [vmem:[#allocation3] sm:$0xff]
    %v64 = vld [vmem:[#allocation3 + $0x8] sm:$0xff]
    %v65 = vld [vmem:[#allocation6] sm:$0xff]
    %v66 = vld [vmem:[#allocation6 + $0x8] sm:$0xff]
    %v67 = vld [vmem:[#allocation6 + $0x10] sm:$0xff]
    %v68 = vld [vmem:[#allocation6 + $0x18] sm:$0xff]
    %v69 = vld [vmem:[%s3] sm:$0x7]
    %v70 = vlaneseq
    %v71 = vshrl.u32 %v70, 7
    %v72 = vsub.s32 0, %v71
    %v73 = vrot.slane %v69, %v72
    %vm74 = vcmask 261120
    %v76 = vsel %vm74, %v63, 0
    %v79 = vsel %vm74, %v64, 0
    %81 = vmatprep.subr.mxu0 0.0
    %82 = vmatpush1.msra.mxu0 %v65
    %83 = vmatprep.subr.mxu0 0.0
    %84 = vmatpush1.msra.mxu0 %v66
    %85 = vmatprep.subr.mxu0 0.0
    %86 = vmatpush1.msra.mxu0 %v67
    %87 = vmatprep.subr.mxu0 0.0
    %88 = vmatpush1.msra.mxu0 %v68
    %89 = vmatprep.subr.mxu0 0.0
    %90 = vmatpush1.msra.mxu0 0.0
    %91 = vmatprep.subr.mxu0 0.0
    %92 = vmatpush1.msra.mxu0 0.0
    %93 = vmatprep.subr.mxu0 0.0
    %94 = vmatpush1.msra.mxu0 0.0
    %95 = vmatprep.subr.mxu0 0.0
    %96 = vmatpush1.msra.mxu0 0.0
    %97 = vmatprep.subr.mxu0 0.0
    %98 = vmatpush1.msra.mxu0 0.0
    %99 = vmatprep.subr.mxu0 0.0
    %100 = vmatpush1.msra.mxu0 0.0
    %101 = vmatprep.subr.mxu0 0.0
    %102 = vmatpush1.msra.mxu0 0.0
    %103 = vmatprep.subr.mxu0 0.0
    %104 = vmatpush1.msra.mxu0 0.0
    %105 = vmatprep.subr.mxu0 0.0
    %106 = vmatpush1.msra.mxu0 0.0
    %107 = vmatprep.subr.mxu0 0.0
    %108 = vmatpush1.msra.mxu0 0.0
    %109 = vmatprep.subr.mxu0 0.0
    %110 = vmatpush1.msra.mxu0 0.0
    %111 = vmatprep.subr.mxu0 0.0
    %112 = vmatpush1.msra.mxu0 0.0
    %113 = vmatprep.subr.mxu0 0.0
    %114 = vmatpush1.msra.mxu0 0.0
    %115 = vmatprep.subr.mxu0 0.0
    %116 = vmatpush1.msra.mxu0 0.0
    %117 = vmatprep.subr.mxu0 0.0
    %118 = vmatpush1.msra.mxu0 0.0
    %119 = vmatprep.subr.mxu0 0.0
    %120 = vmatpush1.msra.mxu0 0.0
    %121 = vmatprep.subr.mxu0 0.0
    %122 = vmatpush1.msra.mxu0 0.0
    %123 = vmatprep.subr.mxu0 0.0
    %124 = vmatpush1.msra.mxu0 0.0
    %125 = vmatprep.subr.mxu0 0.0
    %126 = vmatpush1.msra.mxu0 0.0
    %127 = vmatprep.subr.mxu0 0.0
    %128 = vmatpush1.msra.mxu0 0.0
    %129 = vmatprep.subr.mxu0 0.0
    %130 = vmatpush1.msra.mxu0 0.0
    %131 = vmatprep.subr.mxu0 0.0
    %132 = vmatpush1.msra.mxu0 0.0
    %133 = vmatprep.subr.mxu0 0.0
    %134 = vmatpush1.msra.mxu0 0.0
    %135 = vmatprep.subr.mxu0 0.0
    %136 = vmatpush1.msra.mxu0 0.0
    %137 = vmatprep.subr.mxu0 0.0
    %138 = vmatpush1.msra.mxu0 0.0
    %139 = vmatprep.subr.mxu0 0.0
    %140 = vmatpush1.msra.mxu0 0.0
    %141 = vmatprep.subr.mxu0 0.0
    %142 = vmatpush1.msra.mxu0 0.0
    %143 = vmatprep.subr.mxu0 0.0
    %144 = vmatpush1.msra.mxu0 0.0
    %145 = vmatprep.mubr.f32.mxu0 0.0
    %146 = vmatmul.mubr.f32.gmra.mrb[0].mxu0 %v76
    %v147 = vpop.f32.mrb[0].mxu0
    %v148 = vadd.f32 %v73, %v147
    %v149 = vpop.f32.mrb[0].mxu0
    %150 = vmatprep.mubr.f32.mxu0 0.0
    %151 = vmatmul.mubr.f32.gmra.mrb[0].mxu0 %v79
    %v152 = vpop.f32.mrb[0].mxu0
    %v153 = vadd.f32 %v73, %v152
    %v154 = vpop.f32.mrb[0].mxu0
    %155 = vdwg.mxu0
    %vm156 = vcmask 523264
    %v157 = vsel %vm156, %v148, 0.0
    %158 = vadd.xlane.f32.xlu0 %v157
    %v159 = vpop.xlane.xlu0 %158
    %v160 = vsel %vm156, %v153, 0.0
    %161 = vadd.xlane.f32.xlu0 %v160
    %v162 = vpop.xlane.xlu0 %161
    %v163 = vmul.f32 %v148, %v148
    %v164 = vmul.f32 %v153, %v153
    %v165 = vsel %vm156, %v163, 0.0
    %166 = vadd.xlane.f32.xlu0 %v165
    %v167 = vpop.xlane.xlu0 %166
    %v168 = vsel %vm156, %v164, 0.0
    %169 = vadd.xlane.f32.xlu0 %v168
    %v170 = vpop.xlane.xlu0 %169
    %v171 = vmul.f32 %v159, 0.015625
    %v172 = vmul.f32 %v162, 0.015625
    %v173 = vmul.f32 %v167, 0.015625
    %v174 = vmul.f32 %v170, 0.015625
    %v175 = vmul.f32 %v171, %v171
    %v176 = vmul.f32 %v172, %v172
    %v177 = vsub.f32 %v173, %v175
    %v178 = vsub.f32 %v174, %v176
    %v179 = vadd.f32 %v177, 1e-05
    %v180 = vadd.f32 %v178, 1e-05
    %v181 = vrsqrt.pop %v179
    %v182 = vrsqrt.pop %v180
    %v183 = vsub.f32 %v148, %v171
    %v184 = vsub.f32 %v153, %v172
    %v185 = vlaneseq
    %v186 = vshrl.u32 %v185, 7
    %v187 = vsub.s32 1, %v186
    %v188 = vrot.slane %v69, %v187
    %v189 = vmul.f32 %v181, %v188
    %v190 = vmul.f32 %v182, %v188
    %v191 = vmul.f32 %v183, %v189
    %v192 = vmul.f32 %v184, %v190
    %v193 = vlaneseq
    %v194 = vshrl.u32 %v193, 7
    %v195 = vsub.s32 2, %v194
    %v196 = vrot.slane %v69, %v195
    %v197 = vadd.f32 %v191, %v196
    %v198 = vadd.f32 %v192, %v196
    %vm199 = vcmp.ge.f32.partialorder %v197, 0.0
    %vm200 = vcmp.ge.f32.partialorder %v198, 0.0
    %v201 = vmul.f32 %v197, 0.01
    %v202 = vmul.f32 %v198, 0.01
    %v203 = vsel %vm199, %v197, %v201
    %v204 = vsel %vm200, %v198, %v202
    %v205 = vld [vmem:[#allocation8] sm:$0xff]
    %v206 = vld [vmem:[#allocation8 + $0x8] sm:$0xff]
    %v207 = vadd.f32 %v203, %v205
    %v208 = vadd.f32 %v204, %v206
    %209 = vst.msk [vmem:[#allocation9] sm:$0xff] %vm156, %v207
    %210 = vst.msk [vmem:[#allocation9 + $0x8] sm:$0xff] %vm156, %v208
    // Predicated region
    $region34: #{tpu_custom_call.1} parent=1 // pred_check
      _
    $region35: #{tpu_custom_call.1} parent=1 // pred_check_branch
      %212 = sbr.rel (0) target = $region37
    $region36: #{tpu_custom_call.1} parent=1 // pred_region
      %s214 = ssub.s32 256, 256
      %215 = vsyncadd [#allocation5], %s214
      %s216 = sshll.u32 [#allocation9], 4
      %s217 = int_to_ptr.vmem [resolvable:$true] %s216
      %222 = dma.vmem_to_hbm [thread:$0]  %s217, 256, %s5, [#allocation5], 128, 128, 8
    $region37: #{tpu_custom_call.1} parent=1 // pred_fallthru
      _
    // Predicated region
    $region38: #{tpu_custom_call.1} parent=1 // pred_check
      _
    $region39: #{tpu_custom_call.1} parent=1 // pred_check_branch
      %224 = sbr.rel (0) target = $region41
    $region40: #{tpu_custom_call.1} parent=1 // pred_region
      %225 = dma.done [#allocation5], 256
    $region41: #{tpu_custom_call.1} parent=1 // pred_fallthru
      _
    %226 = vsyncpa [#allocation4], 1
    %227 = vsyncpa [#allocation7], 1
    %228 = vsyncpa [#allocation5], 1

</llo_original>
